<compile_context>
chip_gen: v7x
topology: tpu7x:2x2x1
jax: 0.10.0
libtpu: 0.0.40
codegen_flags: <defaults>
</compile_context>

<pallas_src>
import functools

import jax
import jax.numpy as jnp
from jax.experimental import pallas as pl
from jax.experimental.pallas import tpu as pltpu


def _ls_ce_kernel(x_ref, tgt_ref, out_ref, *, confidence, smoothing, n_rows, tile_n):
    # x_ref: (TN, C) storage dtype; tgt_ref: (TN, 1) int32; out_ref: (1, 8, 128) f32
    i = pl.program_id(0)
    xr = x_ref[...]                                                   # (TN, C) storage dtype
    C = xr.shape[-1]

    # Row max in the storage dtype (exact), then a single upcast for the exp/sum pass.
    m = jnp.max(xr, axis=-1, keepdims=True).astype(jnp.float32)       # (TN, 1)
    x = xr.astype(jnp.float32)                                        # (TN, C)

    # Numerically stable log partition: log_z = m + log(sum(exp(x - m)))
    lse = jnp.log(jnp.sum(jnp.exp(x - m), axis=-1, keepdims=True))    # (TN, 1)
    log_z = m + lse                                                   # (TN, 1)

    # Fused weighted row-sum: w_c = smoothing/C + confidence * [c == tgt]
    tgt = tgt_ref[...]                                                # (TN, 1)
    col = jax.lax.broadcasted_iota(jnp.int32, x.shape, 1)
    base = smoothing / C
    w = jnp.where(col == tgt, confidence + base, base)                # (TN, C), const select
    wsum = jnp.sum(w * x, axis=-1, keepdims=True)                     # (TN, 1)
    per_row = log_z - wsum                                            # (TN, 1)

    # Mask rows past the true batch size (remainder tile reads stale VMEM rows; select
    # kills any NaN/Inf they produced).
    row = jax.lax.broadcasted_iota(jnp.int32, per_row.shape, 0)       # (TN, 1)
    valid = n_rows - i * tile_n
    masked = jnp.where(row < valid, per_row, 0.0)

    # Per-tile partial sum, written as a lane-dense (1, 8, 128) block.
    partial = jnp.sum(masked)
    out_ref[...] = jnp.full(out_ref.shape, partial, dtype=jnp.float32)


def _round_up(a: int, b: int) -> int:
    return ((a + b - 1) // b) * b


def label_smoothing_cross_entropy(x, target, smoothing: float = 0.1, tile_n: int | None = None):
    """x: (N, C) float (f32 or bf16), target: (N,) int -> scalar float32 loss."""
    assert smoothing < 1.0
    N, C = x.shape
    confidence = 1.0 - smoothing
    tgt2d = target.astype(jnp.int32).reshape(N, 1)

    itemsize = jnp.dtype(x.dtype).itemsize
    # Sublane multiple of the packed storage layout: f32 -> 8, bf16 -> 16, int8/fp8 -> 32.
    mult = max(8, 32 // itemsize)

    if tile_n is None:
        # Budget live VMEM per grid step: 2x double-buffered input DMA + ~4 f32-sized
        # full-tile temporaries (f32 copy, exp(x-m), weights, product).  ~20 MiB keeps the
        # logits tile at ~2 MiB (bf16) / ~3.3 MiB (f32), well inside every generation's
        # scoped VMEM once vmem_limit_bytes is raised below (v7x physical = 64 MiB).
        live_budget = 20 * 1024 * 1024
        per_row_bytes = C * (2 * itemsize + 4 * 4)
        tn = max(mult, (live_budget // per_row_bytes) // mult * mult)
        # Keep >= 2 grid blocks when N allows, so v7x's two TensorCores both get work.
        if N >= 2 * mult:
            tn = min(tn, _round_up(pl.cdiv(N, 2), mult))
    else:
        tn = tile_n

    if N <= tn:
        tn = N   # single block: block dims == full array dims, any N is legal
    else:
        assert tn % mult == 0, f"row tile {tn} must be a multiple of {mult} for dtype {x.dtype}"

    grid_n = pl.cdiv(N, tn)
    kernel = functools.partial(
        _ls_ce_kernel, confidence=confidence, smoothing=smoothing, n_rows=N, tile_n=tn
    )

    partials = pl.pallas_call(
        kernel,
        out_shape=jax.ShapeDtypeStruct((grid_n, 8, 128), jnp.float32),
        grid=(grid_n,),
        in_specs=[
            pl.BlockSpec((tn, C), lambda i: (i, 0)),   # logits tile (DMA'd in storage dtype)
            pl.BlockSpec((tn, 1), lambda i: (i, 0)),   # targets tile
        ],
        out_specs=pl.BlockSpec((1, 8, 128), lambda i: (i, 0, 0)),
        compiler_params=pltpu.CompilerParams(
            dimension_semantics=("parallel",),
            vmem_limit_bytes=40 * 1024 * 1024,
        ),
    )(x, tgt2d)

    # Exact mean over the true batch size (masked rows contributed exactly 0).
    return jnp.sum(partials[:, 0, 0]) / jnp.float32(N)


def _reference(x, target, smoothing=0.1):
    confidence = 1.0 - smoothing
    logprobs = jax.nn.log_softmax(x.astype(jnp.float32), axis=-1)
    nll = -jnp.take_along_axis(logprobs, target[:, None].astype(jnp.int32), axis=-1)[:, 0]
    smooth = -jnp.mean(logprobs, axis=-1)
    return jnp.mean(confidence * nll + smoothing * smooth)


if __name__ == "__main__":
    key = jax.random.PRNGKey(0)

    # Test 1: small f32, single block (block dims == full array dims).
    k1, k2, key = jax.random.split(key, 3)
    N, C = 8, 32
    x = jax.random.normal(k1, (N, C), dtype=jnp.float32)
    target = jax.random.randint(k2, (N,), 0, C, dtype=jnp.int32)
    loss = label_smoothing_cross_entropy(x, target, smoothing=0.1)
    jax.block_until_ready(loss)
    ref = _reference(x, target, smoothing=0.1)
    assert jnp.allclose(loss, ref, atol=1e-5, rtol=1e-5), (loss, ref)

    # Test 2: f32 with a grid over N and a remainder block (N % tile_n != 0).
    k1, k2, key = jax.random.split(key, 3)
    N, C = 37, 160
    x = jax.random.normal(k1, (N, C), dtype=jnp.float32)
    target = jax.random.randint(k2, (N,), 0, C, dtype=jnp.int32)
    loss = label_smoothing_cross_entropy(x, target, smoothing=0.1, tile_n=16)
    jax.block_until_ready(loss)
    ref = _reference(x, target, smoothing=0.1)
    assert jnp.allclose(loss, ref, atol=1e-4, rtol=1e-5), (loss, ref)

    # Test 3: bf16 logits kept bf16 through the DMA, upcast per tile inside the kernel.
    k1, k2, key = jax.random.split(key, 3)
    N, C = 64, 256
    x = jax.random.normal(k1, (N, C), dtype=jnp.float32).astype(jnp.bfloat16)
    target = jax.random.randint(k2, (N,), 0, C, dtype=jnp.int32)
    loss = label_smoothing_cross_entropy(x, target, smoothing=0.1, tile_n=16)
    jax.block_until_ready(loss)
    ref = _reference(x, target, smoothing=0.1)
    assert jnp.allclose(loss, ref, atol=1e-4, rtol=1e-4), (loss, ref)

    # Test 4: auto tiling path (>=2 blocks + remainder masking) on an odd-sized f32 input.
    k1, k2, key = jax.random.split(key, 3)
    N, C = 333, 130
    x = jax.random.normal(k1, (N, C), dtype=jnp.float32)
    target = jax.random.randint(k2, (N,), 0, C, dtype=jnp.int32)
    loss = label_smoothing_cross_entropy(x, target, smoothing=0.1)
    jax.block_until_ready(loss)
    ref = _reference(x, target, smoothing=0.1)
    assert jnp.allclose(loss, ref, atol=1e-4, rtol=1e-5), (loss, ref)

    print("KERNEL_OK")
</pallas_src>

<mosaic_0001>
module attributes {stable_mosaic.version = 11 : i64} {
  func.func @_ls_ce_kernel(%arg0: i32, %arg1: memref<8x32xf32, #tpu.memory_space<vmem>>, %arg2: memref<8x1xi32, #tpu.memory_space<vmem>>, %arg3: memref<1x8x128xf32, #tpu.memory_space<vmem>>) attributes {dimension_semantics = [#tpu.dimension_semantics<parallel>], iteration_bounds = array<i64: 1>, scalar_prefetch = 0 : i64, scratch_operands = 0 : i64, tpu.core_type = #tpu.core_type<tc>, window_params = [{transform_indices = @transform_0, window_bounds = array<i64: 8, 32>}, {transform_indices = @transform_1, window_bounds = array<i64: 8, 1>}, {transform_indices = @transform_2, window_bounds = array<i64: 1, 8, 128>}]} {
    %c0 = arith.constant 0 : index
    %c0_0 = arith.constant 0 : index
    %0 = vector.load %arg1[%c0, %c0_0] : memref<8x32xf32, #tpu.memory_space<vmem>>, vector<8x32xf32>
    %cst = arith.constant dense<0xFF800000> : vector<8xf32>
    %1 = vector.multi_reduction <maximumf>, %0, %cst [1] : vector<8x32xf32> to vector<8xf32>
    %2 = vector.shape_cast %1 : vector<8xf32> to vector<8x1xf32>
    %3 = vector.broadcast %2 : vector<8x1xf32> to vector<8x32xf32>
    %4 = arith.subf %0, %3 : vector<8x32xf32>
    %5 = math.exp %4 : vector<8x32xf32>
    %cst_1 = arith.constant dense<0.000000e+00> : vector<8xf32>
    %6 = vector.multi_reduction <add>, %5, %cst_1 [1] : vector<8x32xf32> to vector<8xf32>
    %7 = vector.shape_cast %6 : vector<8xf32> to vector<8x1xf32>
    %8 = math.log %7 : vector<8x1xf32>
    %9 = arith.addf %2, %8 : vector<8x1xf32>
    %c0_2 = arith.constant 0 : index
    %c0_3 = arith.constant 0 : index
    %10 = vector.load %arg2[%c0_2, %c0_3] : memref<8x1xi32, #tpu.memory_space<vmem>>, vector<8x1xi32>
    %11 = tpu.iota {dimensions = array<i32: 1>} : vector<8x32xi32>
    %12 = vector.broadcast %10 : vector<8x1xi32> to vector<8x32xi32>
    %13 = arith.cmpi eq, %11, %12 : vector<8x32xi32>
    %cst_4 = arith.constant 0.903124988 : f32
    %cst_5 = arith.constant 3.125000e-03 : f32
    %14 = vector.broadcast %cst_4 : f32 to vector<8x32xf32>
    %15 = vector.broadcast %cst_5 : f32 to vector<8x32xf32>
    %16 = arith.select %13, %14, %15 : vector<8x32xi1>, vector<8x32xf32>
    %17 = arith.mulf %16, %0 : vector<8x32xf32>
    %cst_6 = arith.constant dense<0.000000e+00> : vector<8xf32>
    %18 = vector.multi_reduction <add>, %17, %cst_6 [1] : vector<8x32xf32> to vector<8xf32>
    %19 = vector.shape_cast %18 : vector<8xf32> to vector<8x1xf32>
    %20 = arith.subf %9, %19 : vector<8x1xf32>
    %21 = tpu.iota {dimensions = array<i32: 0>} : vector<8x1xi32>
    %c8_i32 = arith.constant 8 : i32
    %22 = arith.muli %arg0, %c8_i32 : i32
    %c8_i32_7 = arith.constant 8 : i32
    %23 = arith.subi %c8_i32_7, %22 : i32
    %24 = vector.broadcast %23 : i32 to vector<8x1xi32>
    %25 = arith.cmpi slt, %21, %24 : vector<8x1xi32>
    %cst_8 = arith.constant 0.000000e+00 : f32
    %26 = vector.broadcast %cst_8 : f32 to vector<8x1xf32>
    %27 = arith.select %25, %20, %26 : vector<8x1xi1>, vector<8x1xf32>
    %28 = vector.shape_cast %27 : vector<8x1xf32> to vector<1x8x1xf32>
    %cst_9 = arith.constant dense<0.000000e+00> : vector<1xf32>
    %29 = vector.multi_reduction <add>, %28, %cst_9 [1, 2] : vector<1x8x1xf32> to vector<1xf32>
    %30 = vector.shape_cast %29 : vector<1xf32> to vector<1x1x1xf32>
    %31 = vector.extract %30[0, 0, 0] : f32 from vector<1x1x1xf32>
    %32 = vector.broadcast %31 : f32 to vector<1x8x128xf32>
    %c0_10 = arith.constant 0 : index
    %c0_11 = arith.constant 0 : index
    %c0_12 = arith.constant 0 : index
    %33 = vector.load %arg3[%c0_10, %c0_11, %c0_12] : memref<1x8x128xf32, #tpu.memory_space<vmem>>, vector<1x8x128xf32>
    tpu.vector_store %arg3[%c0_10, %c0_11, %c0_12], %32 {strides = array<i32>} : memref<1x8x128xf32, #tpu.memory_space<vmem>>, vector<1x8x128xf32>,
    return
  }
  func.func @transform_0(%arg0: i32) -> (i32, i32) {
    %c0_i32 = arith.constant 0 : i32
    %c0_i32_0 = arith.constant 0 : i32
    return %arg0, %c0_i32 : i32, i32
  }
  func.func @transform_1(%arg0: i32) -> (i32, i32) {
    %c0_i32 = arith.constant 0 : i32
    %c0_i32_0 = arith.constant 0 : i32
    return %arg0, %c0_i32 : i32, i32
  }
  func.func @transform_2(%arg0: i32) -> (i32, i32, i32) {
    %c0_i32 = arith.constant 0 : i32
    %c0_i32_0 = arith.constant 0 : i32
    %c0_i32_1 = arith.constant 0 : i32
    return %arg0, %c0_i32, %c0_i32_0 : i32, i32, i32
  }
}

</mosaic_0001>

<llo_original>
// kernel: tpu_custom_call.1
$region0: #{tpu_custom_call.1}
  #allocation0 [shape = 'u32[]', space=smem, size = 0x4, offset = 0x4, fixed_abs, tag = 'smem constant byte address 0x4 - core index']
  #allocation1 [shape = 'u32[144,128]{1,0:T(1,128)}', space=vmem, size = 0x12000, scoped, tag = 'internal scratch']
  %s0 = inlined_call_operand.vmem [shape: f32[8,32], index: 0, kind: input, shape index: {}]
  %s1 = inlined_call_operand.vmem [shape: s32[8,1], index: 1, kind: input, shape index: {}]
  %s2 = inlined_call_operand.hbm [shape: f32[1,8,128], index: 2, kind: output, shape index: {}]
  %s3 = sld [smem:[#allocation0]]
  $region18: #{tpu_custom_call.1} parent=0
    _
  %s5 = ssub.s32 1, %s3
  %s6 = scalar_select 0, %s5, %s3
  $region1: #{tpu_custom_call.1} parent=0
    #allocation2 [shape = 'u8[4096]{0}', space=vmem, size = 0x1000, scoped, tag = 'output window, operand 0, single buffered']
    #allocation3 [shape = 's32[1]{0}', space=sflag, size = 0x4, scoped, tag = 'scoped memory for tpu_custom_call.1']
    %7 = vsyncpa [#allocation3], 0
    // Predicated region
    $region2: #{tpu_custom_call.1} parent=1 // pred_check
      _
    $region3: #{tpu_custom_call.1} parent=1 // pred_check_branch
      %9 = sbr.rel (0) target = $region5
    $region4: #{tpu_custom_call.1} parent=1 // pred_region
      _
    $region5: #{tpu_custom_call.1} parent=1 // pred_fallthru
      _
    // Predicated region
    $region6: #{tpu_custom_call.1} parent=1 // pred_check
      _
    $region7: #{tpu_custom_call.1} parent=1 // pred_check_branch
      %11 = sbr.rel (0) target = $region9
    $region8: #{tpu_custom_call.1} parent=1 // pred_region
      _
    $region9: #{tpu_custom_call.1} parent=1 // pred_fallthru
      _
    %v12 = vld [vmem:[%s0] sm:$0xff]
    %vm13 = vcmask 261120
    %v14 = vsel %vm13, %v12, -inf
    %15 = vmax.xlane.f32.xlu0 %v14
    %v16 = vpop.xlane.xlu0 %15
    %v17 = vsub.f32 %v12, %v16
    %v18 = vmul.f32 %v17, 1.442695
    %v19 = vpow.pop %v18
    %v20 = vsel %vm13, %v19, 0.0
    %21 = vadd.xlane.f32.xlu0 %v20
    %v22 = vpop.xlane.xlu0 %21
    %v23 = vlog2.pop %v22
    %v24 = vmul.f32 %v23, 0.6931472
    %v25 = vadd.f32 %v16, %v24
    %v26 = vld [vmem:[%s1] sm:$0xff]
    %v27 = vlaneseq
    %v28 = vand.u32 %v27, 127
    %29 = vset.pattern.permute.xlu0 0
    %30 = vperm.xlu0 %29, %v26
    %v31 = vpop.permute.xlu0 %30
    %vm32 = vcmp.eq.s32.totalorder %v28, %v31
    %v33 = vsel %vm32, 0.903125, 0.003125
    %v34 = vmul.f32 %v33, %v12
    %v35 = vsel %vm13, %v34, 0.0
    %36 = vadd.xlane.f32.xlu0 %v35
    %v37 = vpop.xlane.xlu0 %36
    %v38 = vsub.f32 %v25, %v37
    %v39 = vlaneseq
    %v40 = vshrl.u32 %v39, 7
    %s41 = smul.u32 0, 8
    %s42 = ssub.s32 8, %s41
    %v43 = vstv %s42
    %vm44 = vcmp.lt.s32.totalorder %v40, %v43
    %v45 = vsel %vm44, %v38, 0.0
    %vm46 = vcmask 7168
    %v47 = vsel %vm46, %v45, 0.0
    %48 = vadd.xlane.f32.xlu0 %v47
    %v49 = vpop.xlane.xlu0 %48
    %v50 = vrot.slane %v49, 4
    %v51 = vadd.f32 %v49, %v50
    %v52 = vrot.slane %v51, 2
    %v53 = vadd.f32 %v51, %v52
    %v54 = vrot.slane %v53, 1
    %v55 = vadd.f32 %v53, %v54
    %s56 = vtos %v55
    %v57 = vstv %s56
    %58 = vst [vmem:[#allocation2] sm:$0xff] %v57
    // Predicated region
    $region10: #{tpu_custom_call.1} parent=1 // pred_check
      _
    $region11: #{tpu_custom_call.1} parent=1 // pred_check_branch
      %60 = sbr.rel (0) target = $region13
    $region12: #{tpu_custom_call.1} parent=1 // pred_region
      %s62 = ssub.s32 128, 128
      %63 = vsyncadd [#allocation3], %s62
      %s65 = sshll.u32 [#allocation2], 4
      %s66 = int_to_ptr.vmem [resolvable:$true] %s65
      %68 = dma.vmem_to_hbm [thread:$0]  %s66, 128, %s2, [#allocation3]
    $region13: #{tpu_custom_call.1} parent=1 // pred_fallthru
      _
    // Predicated region
    $region14: #{tpu_custom_call.1} parent=1 // pred_check
      _
    $region15: #{tpu_custom_call.1} parent=1 // pred_check_branch
      %70 = sbr.rel (0) target = $region17
    $region16: #{tpu_custom_call.1} parent=1 // pred_region
      %71 = dma.done [#allocation3], 128
    $region17: #{tpu_custom_call.1} parent=1 // pred_fallthru
      _
    %72 = vsyncpa [#allocation3], 1

</llo_original>
